<compile_context>
chip_gen: v5e
topology: v5e:2x2
jax: 0.10.0
libtpu: 0.0.40
codegen_flags: <defaults>
</compile_context>

<pallas_src>
import jax
import jax.numpy as jnp
from jax.experimental import pallas as pl
from jax.experimental.pallas import tpu as pltpu


def _channel_attention_kernel(x_ref, w1t_ref, w2t_ref, o_ref):
    # x_ref:   (tile, Cf)  lane-dense row slab (Cf == 128 when folding applies)
    # w1t_ref: (Cf, Hf)    block-diagonal-folded W1.T, activation dtype
    # w2t_ref: (Hf, Cf)    block-diagonal-folded W2.T, f32
    x = x_ref[...]                                    # native dtype (bf16 stays bf16)

    # Linear(C -> H, bias=False) + ReLU; MXU with f32 accumulation, h kept f32.
    h = jnp.maximum(
        jnp.dot(x, w1t_ref[...], preferred_element_type=jnp.float32), 0.0)

    # Linear(H -> C, bias=False); tiny contraction, stays in f32.
    logits = jnp.dot(h, w2t_ref[...], preferred_element_type=jnp.float32)

    # sigmoid(z) == 0.5 * tanh(0.5 * z) + 0.5 : one EUP op instead of exp+div.
    gate = 0.5 * jnp.tanh(0.5 * logits) + 0.5

    # Gate in the activation dtype: no full-block f32 upcast of x.
    o_ref[...] = x * gate.astype(x.dtype)


def _round_up(n, m):
    return ((n + m - 1) // m) * m


def channel_attention_1d(x, w1, w2, *, tile_rows=None):
    """ChannelAttention1D forward.

    x:  (..., C)   activations (Linear acts on the trailing axis)
    w1: (H, C)     first nn.Linear weight, H = C // reduction_ratio
    w2: (C, H)     second nn.Linear weight
    """
    orig_shape = x.shape
    C = orig_shape[-1]
    H, C1 = w1.shape
    assert C1 == C and w2.shape == (C, H)

    x2d = x.reshape(-1, C)                     # free row-major view
    M = x2d.shape[0]
    itemsize = jnp.dtype(x.dtype).itemsize
    sub = max(8, 8 * (4 // itemsize))          # native sublane multiple: 8/16/32

    # ---- lane-dense folding: pack `fold` consecutive rows into one 128-lane
    # row.  fold is the largest power of two <= 128//C that also divides M,
    # so the folding reshape is always a zero-copy view (no pad / no slice).
    fold = 1
    if M > 0 and C % 128 != 0 and 128 % C == 0:
        fmax = 128 // C
        while fold < fmax and M % (2 * fold) == 0:
            fold *= 2
    # TODO: for C not dividing 128 (e.g. 48, 96) one could zero-pad the
    # channel axis of the weights to stay lane-dense; not needed for this module.
    Cf, Hf = fold * C, fold * H

    # Folded (block-diagonal) transposed weights: tiny, built once outside the
    # kernel.  W1.T in the activation dtype (native MXU operands), W2.T in f32
    # (second matmul consumes the f32 hidden activations).
    w1t = w1.T.astype(x.dtype)                 # (C, H)
    w2t = w2.T.astype(jnp.float32)             # (H, C)
    if fold > 1:
        w1t = jax.scipy.linalg.block_diag(*([w1t] * fold))   # (Cf, Hf)
        w2t = jax.scipy.linalg.block_diag(*([w2t] * fold))   # (Hf, Cf)

    Mf = max(M // fold, 1)
    xf = x2d.reshape(Mf, Cf)                   # free view

    # ---- row tiling: ~4 MiB input blocks, sublane aligned, >=2 grid steps
    # when possible (two v7x TensorCores), last block partial/masked.
    if tile_rows is None:
        tile_rows = max(sub, ((4 << 20) // (Cf * itemsize)) // sub * sub)
    g = pl.cdiv(Mf, tile_rows)
    if g == 1 and Mf >= 2 * sub:
        g = 2                                  # give both v7x TensorCores a block
    if g <= 1:
        g, tile = 1, Mf                        # single full-extent block
    else:
        tile = _round_up(pl.cdiv(Mf, g), sub)
        g = pl.cdiv(Mf, tile)

    # ---- scoped-VMEM budget: double-buffered in/out blocks + f32 gate temps.
    blk_bytes = tile * Cf * itemsize
    vmem_limit = 4 * blk_bytes + 3 * tile * Cf * 4 + (4 << 20)
    vmem_limit = int(min(max(vmem_limit, 16 << 20), 56 << 20))

    out = pl.pallas_call(
        _channel_attention_kernel,
        out_shape=jax.ShapeDtypeStruct((Mf, Cf), x.dtype),
        grid_spec=pltpu.PrefetchScalarGridSpec(
            num_scalar_prefetch=0,
            grid=(g,),
            in_specs=[
                pl.BlockSpec((tile, Cf), lambda i: (i, 0)),
                pl.BlockSpec((Cf, Hf), lambda i: (0, 0)),   # weights stay resident
                pl.BlockSpec((Hf, Cf), lambda i: (0, 0)),
            ],
            out_specs=pl.BlockSpec((tile, Cf), lambda i: (i, 0)),
        ),
        compiler_params=pltpu.CompilerParams(
            dimension_semantics=("parallel",),
            vmem_limit_bytes=vmem_limit),
    )(xf, w1t, w2t)

    return out.reshape(orig_shape)             # free view back to (..., C)


def reference(x, w1, w2):
    xf = x.astype(jnp.float32)
    h = jnp.maximum(xf @ w1.T.astype(jnp.float32), 0.0)
    s = jax.nn.sigmoid(h @ w2.T.astype(jnp.float32))
    return xf * s


def _check(shape, C, R, key, dtype=jnp.float32, atol=1e-4, rtol=1e-4):
    H = max(C // R, 1)
    kx, kw1, kw2 = jax.random.split(key, 3)
    x = jax.random.normal(kx, shape + (C,), dtype=jnp.float32).astype(dtype)
    w1 = (jax.random.normal(kw1, (H, C), dtype=jnp.float32) * 0.1).astype(dtype)
    w2 = (jax.random.normal(kw2, (C, H), dtype=jnp.float32) * 0.1).astype(dtype)
    y = jax.block_until_ready(channel_attention_1d(x, w1, w2))
    y_ref = reference(x, w1, w2)
    assert y.shape == x.shape and y.dtype == x.dtype
    assert jnp.allclose(y.astype(jnp.float32), y_ref, atol=atol, rtol=rtol), (shape, dtype)


if __name__ == "__main__":
    key = jax.random.PRNGKey(0)
    k0, k1, k2, k3, k4, k5 = jax.random.split(key, 6)

    # num_channels=32, reduction_ratio=16 -> hidden=2; M=16 -> fold=4 (lane-dense)
    _check((2, 8), C=32, R=16, key=k0)
    # M=15 (odd) -> fold=1 masked-lane fallback path
    _check((3, 5), C=32, R=16, key=k1)
    # M=18 -> fold=2 half-dense path
    _check((3, 6), C=32, R=16, key=k2)
    # C already a multiple of 128 (fold=1, natively lane-dense)
    _check((2, 4), C=128, R=16, key=k3)
    # larger M exercises the multi-block grid (>=2 steps, partial last block)
    _check((4, 64), C=32, R=16, key=k4)
    # bf16 activation path (f32 accumulation, bf16 gate multiply)
    _check((2, 8), C=32, R=16, key=k5, dtype=jnp.bfloat16, atol=3e-2, rtol=3e-2)

    print("KERNEL_OK")
</pallas_src>

<mosaic_0001>
module attributes {stable_mosaic.version = 11 : i64} {
  func.func @_channel_attention_kernel(%arg0: i32, %arg1: memref<4x128xf32, #tpu.memory_space<vmem>>, %arg2: memref<128x8xf32, #tpu.memory_space<vmem>>, %arg3: memref<8x128xf32, #tpu.memory_space<vmem>>, %arg4: memref<4x128xf32, #tpu.memory_space<vmem>>) attributes {dimension_semantics = [#tpu.dimension_semantics<parallel>], iteration_bounds = array<i64: 1>, scalar_prefetch = 0 : i64, scratch_operands = 0 : i64, tpu.core_type = #tpu.core_type<tc>, window_params = [{transform_indices = @transform_0, window_bounds = array<i64: 4, 128>}, {pipeline_mode = #tpu.pipeline_mode<synchronous>, transform_indices = @transform_1, window_bounds = array<i64: 128, 8>}, {pipeline_mode = #tpu.pipeline_mode<synchronous>, transform_indices = @transform_2, window_bounds = array<i64: 8, 128>}, {transform_indices = @transform_3, window_bounds = array<i64: 4, 128>}]} {
    %c0 = arith.constant 0 : index
    %c0_0 = arith.constant 0 : index
    %0 = vector.load %arg1[%c0, %c0_0] : memref<4x128xf32, #tpu.memory_space<vmem>>, vector<4x128xf32>
    %c0_1 = arith.constant 0 : index
    %c0_2 = arith.constant 0 : index
    %1 = vector.load %arg2[%c0_1, %c0_2] : memref<128x8xf32, #tpu.memory_space<vmem>>, vector<128x8xf32>
    %cst = arith.constant dense<0.000000e+00> : vector<4x8xf32>
    %2 = tpu.matmul %0, %1, %cst {dimension_numbers = #tpu.dot_dimension_numbers<[1], [0], [0], [1], [0, 0, 1, 1], [], []>} : vector<4x128xf32>, vector<128x8xf32>, vector<4x8xf32> -> vector<4x8xf32>
    %cst_3 = arith.constant 0.000000e+00 : f32
    %3 = vector.broadcast %cst_3 : f32 to vector<4x8xf32>
    %4 = arith.maximumf %2, %3 : vector<4x8xf32>
    %c0_4 = arith.constant 0 : index
    %c0_5 = arith.constant 0 : index
    %5 = vector.load %arg3[%c0_4, %c0_5] : memref<8x128xf32, #tpu.memory_space<vmem>>, vector<8x128xf32>
    %cst_6 = arith.constant dense<0.000000e+00> : vector<4x128xf32>
    %6 = tpu.matmul %4, %5, %cst_6 {dimension_numbers = #tpu.dot_dimension_numbers<[1], [0], [0], [1], [0, 0, 1, 1], [], []>} : vector<4x8xf32>, vector<8x128xf32>, vector<4x128xf32> -> vector<4x128xf32>
    %cst_7 = arith.constant 5.000000e-01 : f32
    %7 = vector.broadcast %cst_7 : f32 to vector<4x128xf32>
    %8 = arith.mulf %7, %6 : vector<4x128xf32>
    %9 = math.tanh %8 : vector<4x128xf32>
    %cst_8 = arith.constant 5.000000e-01 : f32
    %10 = vector.broadcast %cst_8 : f32 to vector<4x128xf32>
    %11 = arith.mulf %10, %9 : vector<4x128xf32>
    %cst_9 = arith.constant 5.000000e-01 : f32
    %12 = vector.broadcast %cst_9 : f32 to vector<4x128xf32>
    %13 = arith.addf %11, %12 : vector<4x128xf32>
    %14 = arith.mulf %0, %13 : vector<4x128xf32>
    %c0_10 = arith.constant 0 : index
    %c0_11 = arith.constant 0 : index
    %15 = vector.load %arg4[%c0_10, %c0_11] : memref<4x128xf32, #tpu.memory_space<vmem>>, vector<4x128xf32>
    tpu.vector_store %arg4[%c0_10, %c0_11], %14 {strides = array<i32>} : memref<4x128xf32, #tpu.memory_space<vmem>>, vector<4x128xf32>,
    return
  }
  func.func @transform_0(%arg0: i32) -> (i32, i32) {
    %c0_i32 = arith.constant 0 : i32
    %c0_i32_0 = arith.constant 0 : i32
    return %arg0, %c0_i32 : i32, i32
  }
  func.func @transform_1(%arg0: i32) -> (i32, i32) {
    %c0_i32 = arith.constant 0 : i32
    %c0_i32_0 = arith.constant 0 : i32
    %c0_i32_1 = arith.constant 0 : i32
    return %c0_i32, %c0_i32_0 : i32, i32
  }
  func.func @transform_2(%arg0: i32) -> (i32, i32) {
    %c0_i32 = arith.constant 0 : i32
    %c0_i32_0 = arith.constant 0 : i32
    %c0_i32_1 = arith.constant 0 : i32
    return %c0_i32, %c0_i32_0 : i32, i32
  }
  func.func @transform_3(%arg0: i32) -> (i32, i32) {
    %c0_i32 = arith.constant 0 : i32
    %c0_i32_0 = arith.constant 0 : i32
    return %arg0, %c0_i32 : i32, i32
  }
}

</mosaic_0001>

<llo_original>
// kernel: tpu_custom_call.1
$region0: #{tpu_custom_call.1}
  #allocation0 [shape = 'u32[]', space=smem, size = 0x4, offset = 0x4, fixed_abs, tag = 'smem constant byte address 0x4 - core index']
  #allocation1 [shape = 'u32[72,128]{1,0:T(1,128)}', space=vmem, size = 0x9000, scoped, tag = 'internal scratch']
  %s0 = inlined_call_operand.vmem [shape: f32[4,128], index: 0, kind: input, shape index: {}]
  %s1 = inlined_call_operand.vmem [shape: f32[128,8], index: 1, kind: input, shape index: {}]
  %s2 = inlined_call_operand.vmem [shape: f32[8,128], index: 2, kind: input, shape index: {}]
  %s3 = inlined_call_operand.hbm [shape: f32[4,128], index: 3, kind: output, shape index: {}]
  %s4 = sld [smem:[#allocation0]]
  $region22: #{tpu_custom_call.1} parent=0
    _
  %s6 = ssub.s32 1, %s4
  %s7 = scalar_select 0, %s6, %s4
  $region1: #{tpu_custom_call.1} parent=0
    #allocation2 [shape = 'u8[2048]{0}', space=vmem, size = 0x800, scoped, tag = 'output window, operand 0, single buffered']
    #allocation3 [shape = 's32[1]{0}', space=sflag, size = 0x4, scoped, tag = 'scoped memory for tpu_custom_call.1']
    %8 = vsyncpa [#allocation3], 0
    // Predicated region
    $region2: #{tpu_custom_call.1} parent=1 // pred_check
      _
    $region3: #{tpu_custom_call.1} parent=1 // pred_check_branch
      %10 = sbr.rel (0) target = $region5
    $region4: #{tpu_custom_call.1} parent=1 // pred_region
      _
    $region5: #{tpu_custom_call.1} parent=1 // pred_fallthru
      _
    // Predicated region
    $region6: #{tpu_custom_call.1} parent=1 // pred_check
      _
    $region7: #{tpu_custom_call.1} parent=1 // pred_check_branch
      %12 = sbr.rel (0) target = $region9
    $region8: #{tpu_custom_call.1} parent=1 // pred_region
      _
    $region9: #{tpu_custom_call.1} parent=1 // pred_fallthru
      _
    // Predicated region
    $region10: #{tpu_custom_call.1} parent=1 // pred_check
      _
    $region11: #{tpu_custom_call.1} parent=1 // pred_check_branch
      %14 = sbr.rel (0) target = $region13
    $region12: #{tpu_custom_call.1} parent=1 // pred_region
      _
    $region13: #{tpu_custom_call.1} parent=1 // pred_fallthru
      _
    %v15 = vld [vmem:[%s0] sm:$0xf]
    %v16 = vld [vmem:[%s1] sm:$0xff]
    %v17 = vld [vmem:[%s1 + $0x8] sm:$0xff]
    %v18 = vld [vmem:[%s1 + $0x10] sm:$0xff]
    %v19 = vld [vmem:[%s1 + $0x18] sm:$0xff]
    %v20 = vld [vmem:[%s1 + $0x20] sm:$0xff]
    %v21 = vld [vmem:[%s1 + $0x28] sm:$0xff]
    %v22 = vld [vmem:[%s1 + $0x30] sm:$0xff]
    %v23 = vld [vmem:[%s1 + $0x38] sm:$0xff]
    %v24 = vld [vmem:[%s1 + $0x40] sm:$0xff]
    %v25 = vld [vmem:[%s1 + $0x48] sm:$0xff]
    %v26 = vld [vmem:[%s1 + $0x50] sm:$0xff]
    %v27 = vld [vmem:[%s1 + $0x58] sm:$0xff]
    %v28 = vld [vmem:[%s1 + $0x60] sm:$0xff]
    %v29 = vld [vmem:[%s1 + $0x68] sm:$0xff]
    %v30 = vld [vmem:[%s1 + $0x70] sm:$0xff]
    %v31 = vld [vmem:[%s1 + $0x78] sm:$0xff]
    %32 = vmatpush.msra.mxu0 %v31
    %33 = vmatpush.msra.mxu0 %v30
    %34 = vmatpush.msra.mxu0 %v29
    %35 = vmatpush.msra.mxu0 %v28
    %36 = vmatpush.msra.mxu0 %v27
    %37 = vmatpush.msra.mxu0 %v26
    %38 = vmatpush.msra.mxu0 %v25
    %39 = vmatpush.msra.mxu0 %v24
    %40 = vmatpush.msra.mxu0 %v23
    %41 = vmatpush.msra.mxu0 %v22
    %42 = vmatpush.msra.mxu0 %v21
    %43 = vmatpush.msra.mxu0 %v20
    %44 = vmatpush.msra.mxu0 %v19
    %45 = vmatpush.msra.mxu0 %v18
    %46 = vmatpush.msra.mxu0 %v17
    %47 = vmatpush.msra.mxu0 %v16
    %48 = vmatmul.f32.gmra.mxu0 %v15
    %v49 = vpop.f32.mrf.mxu0
    %v50 = vadd.f32 0.0, %v49
    %51 = vdwg.mxu0
    %v52 = vmax.f32 %v50, 0.0
    %v53 = vld [vmem:[%s2] sm:$0xff]
    %vm54 = vcmask 64512
    %v56 = vsel %vm54, %v52, 0
    %58 = vmatpush.msra.mxu0 0.0
    %59 = vmatpush.msra.mxu0 0.0
    %60 = vmatpush.msra.mxu0 0.0
    %61 = vmatpush.msra.mxu0 0.0
    %62 = vmatpush.msra.mxu0 0.0
    %63 = vmatpush.msra.mxu0 0.0
    %64 = vmatpush.msra.mxu0 0.0
    %65 = vmatpush.msra.mxu0 0.0
    %66 = vmatpush.msra.mxu0 0.0
    %67 = vmatpush.msra.mxu0 0.0
    %68 = vmatpush.msra.mxu0 0.0
    %69 = vmatpush.msra.mxu0 0.0
    %70 = vmatpush.msra.mxu0 0.0
    %71 = vmatpush.msra.mxu0 0.0
    %72 = vmatpush.msra.mxu0 0.0
    %73 = vmatpush.msra.mxu0 %v53
    %74 = vmatmul.f32.gmra.mxu0 %v56
    %v75 = vpop.f32.mrf.mxu0
    %v76 = vadd.f32 0.0, %v75
    %77 = vdwg.mxu0
    %v78 = vmul.f32 %v76, 0.5
    %v79 = vtanh.pop %v78
    %v80 = vmul.f32 %v79, 0.5
    %v81 = vadd.f32 %v80, 0.5
    %v82 = vmul.f32 %v15, %v81
    %83 = vst [vmem:[#allocation2] sm:$0xf] %v82
    // Predicated region
    $region14: #{tpu_custom_call.1} parent=1 // pred_check
      _
    $region15: #{tpu_custom_call.1} parent=1 // pred_check_branch
      %85 = sbr.rel (0) target = $region17
    $region16: #{tpu_custom_call.1} parent=1 // pred_region
      %87 = vsyncadd [#allocation3], 0
      %s89 = sshll.u32 [#allocation2], 4
      %s90 = int_to_ptr.vmem [resolvable:$true] %s89
      %s91 = sshll.u32 %s3, 4
      %s92 = int_to_ptr.hbm [resolvable:$true] %s91
      %94 = dma.vmem_to_hbm [thread:$0]  %s90, 64, %s92, [#allocation3]
    $region17: #{tpu_custom_call.1} parent=1 // pred_fallthru
      _
    // Predicated region
    $region18: #{tpu_custom_call.1} parent=1 // pred_check
      _
    $region19: #{tpu_custom_call.1} parent=1 // pred_check_branch
      %96 = sbr.rel (0) target = $region21
    $region20: #{tpu_custom_call.1} parent=1 // pred_region
      %98 = dma.done [#allocation3], 64
    $region21: #{tpu_custom_call.1} parent=1 // pred_fallthru
      _
    %99 = vsyncpa [#allocation3], 1

</llo_original>
